<compile_context>
chip_gen: v6e
topology: v6e:2x2x1
jax: 0.10.0
libtpu: 0.0.40
codegen_flags: <defaults>
</compile_context>

<pallas_src>
import functools

import jax
import jax.numpy as jnp
from jax import lax
from jax.experimental import pallas as pl
from jax.experimental.pallas import tpu as pltpu

_OFFSETS = (-2, -1, 1, 2)   # non-center taps of the 5-tap box filter


def _crp_kernel(x_ref, m_ref, w_ref, o_ref, *, n_stages, W):
    C, HW = x_ref.shape                      # (G*C, HW): channels (and packed images) on sublanes
    x = x_ref[...].astype(jnp.float32)
    masks = m_ref[...]                       # (8, HW) f32: rows 0-3 = W-dir, rows 4-7 = H-dir

    # Hoisted, loop-invariant (shift, mask) pairs.  Each mask row is broadcast to the full
    # (C, HW) slab exactly once (JAX does not CSE broadcast_in_dim) and turned into a bool
    # predicate; jnp.where makes the zero padding exact even for non-finite inputs.
    # pltpu.roll follows jnp.roll semantics: roll(x, s, 1)[p] == x[(p - s) mod HW], so reading
    # x[p + d] needs shift s = (-d) mod HW.
    def tap(row, d, stride):
        s = (-d * stride) % HW
        m = jnp.broadcast_to(masks[row:row + 1, :], (C, HW)) > 0.5
        return s, m

    taps_w = [tap(j, d, 1) for j, d in enumerate(_OFFSETS)]
    taps_h = [tap(4 + j, d, W) for j, d in enumerate(_OFFSETS)]

    top = x
    acc = x
    for i in range(n_stages):                # small static loop, unrolled at trace time
        # --- 5x5 average pool (separable), zero padding, count_include_pad=True.
        #     The 1/25 divisor is folded into the conv weights (wrapper), no extra VPU mul here.
        row = top                            # horizontal 5-tap sum (stays within each image row)
        for s, m in taps_w:
            row = row + jnp.where(m, pltpu.roll(top, shift=s, axis=1), 0.0)
        pooled = row                         # vertical 5-tap sum (across image rows)
        for s, m in taps_h:
            pooled = pooled + jnp.where(m, pltpu.roll(row, shift=s, axis=1), 0.0)
        # --- 1x1 conv, no bias: bf16 x bf16 -> f32 on the MXU (weights already carry 1/25).
        top = jnp.dot(w_ref[i], pooled.astype(jnp.bfloat16),
                      preferred_element_type=jnp.float32)
        acc = acc + top                      # residual accumulate in f32
    o_ref[...] = acc.astype(o_ref.dtype)


def _make_shift_masks(H, W):
    # Row j (j<4):  1.0 where reading lane position p + d stays inside the same image row.
    # Row 4+j:      1.0 where reading image row h + d stays inside the image.
    # (zero-padding contributions are masked out; divisor stays 25 -> count_include_pad=True)
    HW = H * W
    pos = jnp.arange(HW, dtype=jnp.int32)
    w_idx = pos % W
    h_idx = pos // W
    rows = []
    for d in _OFFSETS:
        rows.append(((w_idx + d >= 0) & (w_idx + d < W)).astype(jnp.float32))
    for d in _OFFSETS:
        rows.append(((h_idx + d >= 0) & (h_idx + d < H)).astype(jnp.float32))
    return jnp.stack(rows)                   # (8, HW)


def _pick_group(N, C):
    """Number of images packed per grid step along the sublane (channel) axis.

    Packs G images when C under-fills an f32 vreg (8 sublanes), but keeps >= 2 grid steps
    whenever N >= 2 so both v7x TensorCores get a share of the ("parallel",) grid.
    """
    max_g = max(1, 8 // C)
    best = 1
    for g in range(2, max_g + 1):
        if N % g == 0 and N // g >= 2:
            best = g
    return best


def crp_block(x_nchw, weights, n_stages):
    """x_nchw: (N, C, H, W) float32; weights: (n_stages, C_out, C_in) 1x1 conv kernels (no bias)."""
    N, C, H, W = x_nchw.shape
    n_st, c_out, c_in = weights.shape
    assert n_st == n_stages and c_out == C and c_in == C, \
        "CRPBlock residual requires in_planes == out_planes"
    HW = H * W

    # Sublane packing: fold G images into the channel axis (free reshape, adjacent dims).
    G = _pick_group(N, C)
    GC = G * C
    x_flat = x_nchw.reshape(N // G, GC, HW)

    # Fold the 1/25 avg-pool divisor into the conv weights (one tiny host-side op), replicate
    # block-diagonally across the packed images, and cast to bf16 for the MXU.
    w = weights.astype(jnp.float32) * (1.0 / 25.0)
    if G > 1:
        eye = jnp.eye(G, dtype=jnp.float32)
        w = jnp.einsum("gh,soc->sgohc", eye, w).reshape(n_stages, GC, GC)
    w_bd = w.astype(jnp.bfloat16)

    masks = _make_shift_masks(H, W)          # (8, HW) f32

    # Explicit VMEM budget: double-buffered in/out blocks + ~6 live f32 temporaries + masks
    # + weights, 2x margin, clamped above the v5e default (16 MiB) and below a v7x-safe cap.
    slab = GC * HW * 4
    vmem_need = 4 * slab + 6 * slab + int(masks.size) * 4 + int(w_bd.size) * 2
    vmem_limit = int(min(max(2 * vmem_need, 32 * 2**20), 48 * 2**20))

    out_flat = pl.pallas_call(
        functools.partial(_crp_kernel, n_stages=n_stages, W=W),
        out_shape=jax.ShapeDtypeStruct((N // G, GC, HW), x_nchw.dtype),
        grid_spec=pltpu.PrefetchScalarGridSpec(
            num_scalar_prefetch=0,
            grid=(N // G,),                   # one image-group per step
            in_specs=[
                pl.BlockSpec((None, GC, HW), lambda n: (n, 0, 0)),       # batch dim squeezed
                pl.BlockSpec((8, HW), lambda n: (0, 0)),                 # grid-invariant masks
                pl.BlockSpec((n_stages, GC, GC), lambda n: (0, 0, 0)),   # grid-invariant weights
            ],
            out_specs=pl.BlockSpec((None, GC, HW), lambda n: (n, 0, 0)),
        ),
        compiler_params=pltpu.CompilerParams(
            dimension_semantics=("parallel",),
            vmem_limit_bytes=vmem_limit,
        ),
    )(x_flat, masks, w_bd)

    return out_flat.reshape(N, C, H, W)       # free reshape back to NCHW


def crp_block_ref(x, weights, n_stages):
    # Pure-JAX f32 reference: AvgPool2d(5, stride=1, pad=2, count_include_pad=True) + 1x1 conv.
    top = x
    out = x
    for i in range(n_stages):
        summed = lax.reduce_window(
            top, 0.0, lax.add,
            window_dimensions=(1, 1, 5, 5),
            window_strides=(1, 1, 1, 1),
            padding=[(0, 0), (0, 0), (2, 2), (2, 2)],
        )
        pooled = summed / 25.0
        top = jnp.einsum("oc,nchw->nohw", weights[i], pooled)
        out = top + out
    return out


if __name__ == "__main__":
    key = jax.random.PRNGKey(0)
    N, C, H, W = 4, 4, 16, 16          # in_planes == out_planes == 4 (required for top + x)
    n_stages = 2
    k_x, k_w = jax.random.split(key)

    x = jax.random.normal(k_x, (N, C, H, W), dtype=jnp.float32)
    # Deterministic 1x1 conv weights: (n_stages, out_planes, in_planes), no bias.
    weights = 0.1 * jax.random.normal(k_w, (n_stages, C, C), dtype=jnp.float32)

    out = crp_block(x, weights, n_stages)
    out = jax.block_until_ready(out)

    ref = crp_block_ref(x, weights, n_stages)
    assert out.shape == (N, C, H, W)
    # bf16 MXU matmul (f32 accumulation) -> small rounding vs the f32 reference.
    assert jnp.allclose(out, ref, atol=2e-3, rtol=2e-3), float(jnp.max(jnp.abs(out - ref)))

    print("KERNEL_OK")
</pallas_src>

<mosaic_0001>
module attributes {stable_mosaic.version = 11 : i64} {
  func.func @_crp_kernel(%arg0: i32, %arg1: memref<1x8x256xf32, #tpu.memory_space<vmem>>, %arg2: memref<8x256xf32, #tpu.memory_space<vmem>>, %arg3: memref<2x8x8xbf16, #tpu.memory_space<vmem>>, %arg4: memref<1x8x256xf32, #tpu.memory_space<vmem>>) attributes {dimension_semantics = [#tpu.dimension_semantics<parallel>], iteration_bounds = array<i64: 2>, scalar_prefetch = 0 : i64, scratch_operands = 0 : i64, tpu.core_type = #tpu.core_type<tc>, window_params = [{transform_indices = @transform_0, window_bounds = array<i64: 1, 8, 256>}, {pipeline_mode = #tpu.pipeline_mode<synchronous>, transform_indices = @transform_1, window_bounds = array<i64: 8, 256>}, {pipeline_mode = #tpu.pipeline_mode<synchronous>, transform_indices = @transform_2, window_bounds = array<i64: 2, 8, 8>}, {transform_indices = @transform_3, window_bounds = array<i64: 1, 8, 256>}]} {
    %c0 = arith.constant 0 : index
    %c0_0 = arith.constant 0 : index
    %c0_1 = arith.constant 0 : index
    %0 = vector.load %arg1[%c0, %c0_0, %c0_1] : memref<1x8x256xf32, #tpu.memory_space<vmem>>, vector<1x8x256xf32>
    %1 = vector.shape_cast %0 : vector<1x8x256xf32> to vector<8x256xf32>
    %c0_2 = arith.constant 0 : index
    %c0_3 = arith.constant 0 : index
    %2 = vector.load %arg2[%c0_2, %c0_3] : memref<8x256xf32, #tpu.memory_space<vmem>>, vector<8x256xf32>
    %3 = vector.extract_strided_slice %2 {offsets = [0, 0], sizes = [1, 256], strides = [1, 1]} : vector<8x256xf32> to vector<1x256xf32>
    %4 = vector.shape_cast %3 : vector<1x256xf32> to vector<1x256xf32>
    %5 = vector.broadcast %4 : vector<1x256xf32> to vector<8x256xf32>
    %cst = arith.constant 5.000000e-01 : f32
    %6 = vector.broadcast %cst : f32 to vector<8x256xf32>
    %7 = arith.cmpf ogt, %5, %6 : vector<8x256xf32>
    %8 = vector.extract_strided_slice %2 {offsets = [1, 0], sizes = [1, 256], strides = [1, 1]} : vector<8x256xf32> to vector<1x256xf32>
    %9 = vector.shape_cast %8 : vector<1x256xf32> to vector<1x256xf32>
    %10 = vector.broadcast %9 : vector<1x256xf32> to vector<8x256xf32>
    %cst_4 = arith.constant 5.000000e-01 : f32
    %11 = vector.broadcast %cst_4 : f32 to vector<8x256xf32>
    %12 = arith.cmpf ogt, %10, %11 : vector<8x256xf32>
    %13 = vector.extract_strided_slice %2 {offsets = [2, 0], sizes = [1, 256], strides = [1, 1]} : vector<8x256xf32> to vector<1x256xf32>
    %14 = vector.shape_cast %13 : vector<1x256xf32> to vector<1x256xf32>
    %15 = vector.broadcast %14 : vector<1x256xf32> to vector<8x256xf32>
    %cst_5 = arith.constant 5.000000e-01 : f32
    %16 = vector.broadcast %cst_5 : f32 to vector<8x256xf32>
    %17 = arith.cmpf ogt, %15, %16 : vector<8x256xf32>
    %18 = vector.extract_strided_slice %2 {offsets = [3, 0], sizes = [1, 256], strides = [1, 1]} : vector<8x256xf32> to vector<1x256xf32>
    %19 = vector.shape_cast %18 : vector<1x256xf32> to vector<1x256xf32>
    %20 = vector.broadcast %19 : vector<1x256xf32> to vector<8x256xf32>
    %cst_6 = arith.constant 5.000000e-01 : f32
    %21 = vector.broadcast %cst_6 : f32 to vector<8x256xf32>
    %22 = arith.cmpf ogt, %20, %21 : vector<8x256xf32>
    %23 = vector.extract_strided_slice %2 {offsets = [4, 0], sizes = [1, 256], strides = [1, 1]} : vector<8x256xf32> to vector<1x256xf32>
    %24 = vector.shape_cast %23 : vector<1x256xf32> to vector<1x256xf32>
    %25 = vector.broadcast %24 : vector<1x256xf32> to vector<8x256xf32>
    %cst_7 = arith.constant 5.000000e-01 : f32
    %26 = vector.broadcast %cst_7 : f32 to vector<8x256xf32>
    %27 = arith.cmpf ogt, %25, %26 : vector<8x256xf32>
    %28 = vector.extract_strided_slice %2 {offsets = [5, 0], sizes = [1, 256], strides = [1, 1]} : vector<8x256xf32> to vector<1x256xf32>
    %29 = vector.shape_cast %28 : vector<1x256xf32> to vector<1x256xf32>
    %30 = vector.broadcast %29 : vector<1x256xf32> to vector<8x256xf32>
    %cst_8 = arith.constant 5.000000e-01 : f32
    %31 = vector.broadcast %cst_8 : f32 to vector<8x256xf32>
    %32 = arith.cmpf ogt, %30, %31 : vector<8x256xf32>
    %33 = vector.extract_strided_slice %2 {offsets = [6, 0], sizes = [1, 256], strides = [1, 1]} : vector<8x256xf32> to vector<1x256xf32>
    %34 = vector.shape_cast %33 : vector<1x256xf32> to vector<1x256xf32>
    %35 = vector.broadcast %34 : vector<1x256xf32> to vector<8x256xf32>
    %cst_9 = arith.constant 5.000000e-01 : f32
    %36 = vector.broadcast %cst_9 : f32 to vector<8x256xf32>
    %37 = arith.cmpf ogt, %35, %36 : vector<8x256xf32>
    %38 = vector.extract_strided_slice %2 {offsets = [7, 0], sizes = [1, 256], strides = [1, 1]} : vector<8x256xf32> to vector<1x256xf32>
    %39 = vector.shape_cast %38 : vector<1x256xf32> to vector<1x256xf32>
    %40 = vector.broadcast %39 : vector<1x256xf32> to vector<8x256xf32>
    %cst_10 = arith.constant 5.000000e-01 : f32
    %41 = vector.broadcast %cst_10 : f32 to vector<8x256xf32>
    %42 = arith.cmpf ogt, %40, %41 : vector<8x256xf32>
    %c2_i32 = arith.constant 2 : i32
    %43 = tpu.dynamic_rotate %1 by %c2_i32 dim 1 : vector<8x256xf32>, i32 -> vector<8x256xf32>
    %cst_11 = arith.constant 0.000000e+00 : f32
    %44 = vector.broadcast %cst_11 : f32 to vector<8x256xf32>
    %45 = arith.select %7, %43, %44 : vector<8x256xi1>, vector<8x256xf32>
    %46 = arith.addf %1, %45 : vector<8x256xf32>
    %c1_i32 = arith.constant 1 : i32
    %47 = tpu.dynamic_rotate %1 by %c1_i32 dim 1 : vector<8x256xf32>, i32 -> vector<8x256xf32>
    %cst_12 = arith.constant 0.000000e+00 : f32
    %48 = vector.broadcast %cst_12 : f32 to vector<8x256xf32>
    %49 = arith.select %12, %47, %48 : vector<8x256xi1>, vector<8x256xf32>
    %50 = arith.addf %46, %49 : vector<8x256xf32>
    %c255_i32 = arith.constant 255 : i32
    %51 = tpu.dynamic_rotate %1 by %c255_i32 dim 1 : vector<8x256xf32>, i32 -> vector<8x256xf32>
    %cst_13 = arith.constant 0.000000e+00 : f32
    %52 = vector.broadcast %cst_13 : f32 to vector<8x256xf32>
    %53 = arith.select %17, %51, %52 : vector<8x256xi1>, vector<8x256xf32>
    %54 = arith.addf %50, %53 : vector<8x256xf32>
    %c254_i32 = arith.constant 254 : i32
    %55 = tpu.dynamic_rotate %1 by %c254_i32 dim 1 : vector<8x256xf32>, i32 -> vector<8x256xf32>
    %cst_14 = arith.constant 0.000000e+00 : f32
    %56 = vector.broadcast %cst_14 : f32 to vector<8x256xf32>
    %57 = arith.select %22, %55, %56 : vector<8x256xi1>, vector<8x256xf32>
    %58 = arith.addf %54, %57 : vector<8x256xf32>
    %c32_i32 = arith.constant 32 : i32
    %59 = tpu.dynamic_rotate %58 by %c32_i32 dim 1 : vector<8x256xf32>, i32 -> vector<8x256xf32>
    %cst_15 = arith.constant 0.000000e+00 : f32
    %60 = vector.broadcast %cst_15 : f32 to vector<8x256xf32>
    %61 = arith.select %27, %59, %60 : vector<8x256xi1>, vector<8x256xf32>
    %62 = arith.addf %58, %61 : vector<8x256xf32>
    %c16_i32 = arith.constant 16 : i32
    %63 = tpu.dynamic_rotate %58 by %c16_i32 dim 1 : vector<8x256xf32>, i32 -> vector<8x256xf32>
    %cst_16 = arith.constant 0.000000e+00 : f32
    %64 = vector.broadcast %cst_16 : f32 to vector<8x256xf32>
    %65 = arith.select %32, %63, %64 : vector<8x256xi1>, vector<8x256xf32>
    %66 = arith.addf %62, %65 : vector<8x256xf32>
    %c240_i32 = arith.constant 240 : i32
    %67 = tpu.dynamic_rotate %58 by %c240_i32 dim 1 : vector<8x256xf32>, i32 -> vector<8x256xf32>
    %cst_17 = arith.constant 0.000000e+00 : f32
    %68 = vector.broadcast %cst_17 : f32 to vector<8x256xf32>
    %69 = arith.select %37, %67, %68 : vector<8x256xi1>, vector<8x256xf32>
    %70 = arith.addf %66, %69 : vector<8x256xf32>
    %c224_i32 = arith.constant 224 : i32
    %71 = tpu.dynamic_rotate %58 by %c224_i32 dim 1 : vector<8x256xf32>, i32 -> vector<8x256xf32>
    %cst_18 = arith.constant 0.000000e+00 : f32
    %72 = vector.broadcast %cst_18 : f32 to vector<8x256xf32>
    %73 = arith.select %42, %71, %72 : vector<8x256xi1>, vector<8x256xf32>
    %74 = arith.addf %70, %73 : vector<8x256xf32>
    %c0_19 = arith.constant 0 : index
    %c0_20 = arith.constant 0 : index
    %c0_21 = arith.constant 0 : index
    %75 = vector.load %arg3[%c0_19, %c0_20, %c0_21] : memref<2x8x8xbf16, #tpu.memory_space<vmem>>, vector<1x8x8xbf16>
    %76 = vector.shape_cast %75 : vector<1x8x8xbf16> to vector<8x8xbf16>
    %77 = arith.truncf %74 : vector<8x256xf32> to vector<8x256xbf16>
    %cst_22 = arith.constant dense<0.000000e+00> : vector<8x256xf32>
    %78 = tpu.matmul %76, %77, %cst_22 {dimension_numbers = #tpu.dot_dimension_numbers<[1], [0], [0], [1], [0, 0, 1, 1], [], []>} : vector<8x8xbf16>, vector<8x256xbf16>, vector<8x256xf32> -> vector<8x256xf32>
    %79 = arith.addf %1, %78 : vector<8x256xf32>
    %c2_i32_23 = arith.constant 2 : i32
    %80 = tpu.dynamic_rotate %78 by %c2_i32_23 dim 1 : vector<8x256xf32>, i32 -> vector<8x256xf32>
    %cst_24 = arith.constant 0.000000e+00 : f32
    %81 = vector.broadcast %cst_24 : f32 to vector<8x256xf32>
    %82 = arith.select %7, %80, %81 : vector<8x256xi1>, vector<8x256xf32>
    %83 = arith.addf %78, %82 : vector<8x256xf32>
    %c1_i32_25 = arith.constant 1 : i32
    %84 = tpu.dynamic_rotate %78 by %c1_i32_25 dim 1 : vector<8x256xf32>, i32 -> vector<8x256xf32>
    %cst_26 = arith.constant 0.000000e+00 : f32
    %85 = vector.broadcast %cst_26 : f32 to vector<8x256xf32>
    %86 = arith.select %12, %84, %85 : vector<8x256xi1>, vector<8x256xf32>
    %87 = arith.addf %83, %86 : vector<8x256xf32>
    %c255_i32_27 = arith.constant 255 : i32
    %88 = tpu.dynamic_rotate %78 by %c255_i32_27 dim 1 : vector<8x256xf32>, i32 -> vector<8x256xf32>
    %cst_28 = arith.constant 0.000000e+00 : f32
    %89 = vector.broadcast %cst_28 : f32 to vector<8x256xf32>
    %90 = arith.select %17, %88, %89 : vector<8x256xi1>, vector<8x256xf32>
    %91 = arith.addf %87, %90 : vector<8x256xf32>
    %c254_i32_29 = arith.constant 254 : i32
    %92 = tpu.dynamic_rotate %78 by %c254_i32_29 dim 1 : vector<8x256xf32>, i32 -> vector<8x256xf32>
    %cst_30 = arith.constant 0.000000e+00 : f32
    %93 = vector.broadcast %cst_30 : f32 to vector<8x256xf32>
    %94 = arith.select %22, %92, %93 : vector<8x256xi1>, vector<8x256xf32>
    %95 = arith.addf %91, %94 : vector<8x256xf32>
    %c32_i32_31 = arith.constant 32 : i32
    %96 = tpu.dynamic_rotate %95 by %c32_i32_31 dim 1 : vector<8x256xf32>, i32 -> vector<8x256xf32>
    %cst_32 = arith.constant 0.000000e+00 : f32
    %97 = vector.broadcast %cst_32 : f32 to vector<8x256xf32>
    %98 = arith.select %27, %96, %97 : vector<8x256xi1>, vector<8x256xf32>
    %99 = arith.addf %95, %98 : vector<8x256xf32>
    %c16_i32_33 = arith.constant 16 : i32
    %100 = tpu.dynamic_rotate %95 by %c16_i32_33 dim 1 : vector<8x256xf32>, i32 -> vector<8x256xf32>
    %cst_34 = arith.constant 0.000000e+00 : f32
    %101 = vector.broadcast %cst_34 : f32 to vector<8x256xf32>
    %102 = arith.select %32, %100, %101 : vector<8x256xi1>, vector<8x256xf32>
    %103 = arith.addf %99, %102 : vector<8x256xf32>
    %c240_i32_35 = arith.constant 240 : i32
    %104 = tpu.dynamic_rotate %95 by %c240_i32_35 dim 1 : vector<8x256xf32>, i32 -> vector<8x256xf32>
    %cst_36 = arith.constant 0.000000e+00 : f32
    %105 = vector.broadcast %cst_36 : f32 to vector<8x256xf32>
    %106 = arith.select %37, %104, %105 : vector<8x256xi1>, vector<8x256xf32>
    %107 = arith.addf %103, %106 : vector<8x256xf32>
    %c224_i32_37 = arith.constant 224 : i32
    %108 = tpu.dynamic_rotate %95 by %c224_i32_37 dim 1 : vector<8x256xf32>, i32 -> vector<8x256xf32>
    %cst_38 = arith.constant 0.000000e+00 : f32
    %109 = vector.broadcast %cst_38 : f32 to vector<8x256xf32>
    %110 = arith.select %42, %108, %109 : vector<8x256xi1>, vector<8x256xf32>
    %111 = arith.addf %107, %110 : vector<8x256xf32>
    %c1 = arith.constant 1 : index
    %c0_39 = arith.constant 0 : index
    %c0_40 = arith.constant 0 : index
    %112 = vector.load %arg3[%c1, %c0_39, %c0_40] : memref<2x8x8xbf16, #tpu.memory_space<vmem>>, vector<1x8x8xbf16>
    %113 = vector.shape_cast %112 : vector<1x8x8xbf16> to vector<8x8xbf16>
    %114 = arith.truncf %111 : vector<8x256xf32> to vector<8x256xbf16>
    %cst_41 = arith.constant dense<0.000000e+00> : vector<8x256xf32>
    %115 = tpu.matmul %113, %114, %cst_41 {dimension_numbers = #tpu.dot_dimension_numbers<[1], [0], [0], [1], [0, 0, 1, 1], [], []>} : vector<8x8xbf16>, vector<8x256xbf16>, vector<8x256xf32> -> vector<8x256xf32>
    %116 = arith.addf %79, %115 : vector<8x256xf32>
    %c0_42 = arith.constant 0 : index
    %c0_43 = arith.constant 0 : index
    %c0_44 = arith.constant 0 : index
    %117 = vector.load %arg4[%c0_42, %c0_43, %c0_44] : memref<1x8x256xf32, #tpu.memory_space<vmem>>, vector<1x8x256xf32>
    %118 = vector.shape_cast %117 : vector<1x8x256xf32> to vector<8x256xf32>
    %119 = vector.shape_cast %116 : vector<8x256xf32> to vector<1x8x256xf32>
    tpu.vector_store %arg4[%c0_42, %c0_43, %c0_44], %119 {strides = array<i32>} : memref<1x8x256xf32, #tpu.memory_space<vmem>>, vector<1x8x256xf32>,
    return
  }
  func.func @transform_0(%arg0: i32) -> (i32, i32, i32) {
    %c0_i32 = arith.constant 0 : i32
    %c0_i32_0 = arith.constant 0 : i32
    %c0_i32_1 = arith.constant 0 : i32
    return %arg0, %c0_i32, %c0_i32_0 : i32, i32, i32
  }
  func.func @transform_1(%arg0: i32) -> (i32, i32) {
    %c0_i32 = arith.constant 0 : i32
    %c0_i32_0 = arith.constant 0 : i32
    %c0_i32_1 = arith.constant 0 : i32
    return %c0_i32, %c0_i32_0 : i32, i32
  }
  func.func @transform_2(%arg0: i32) -> (i32, i32, i32) {
    %c0_i32 = arith.constant 0 : i32
    %c0_i32_0 = arith.constant 0 : i32
    %c0_i32_1 = arith.constant 0 : i32
    %c0_i32_2 = arith.constant 0 : i32
    return %c0_i32, %c0_i32_0, %c0_i32_1 : i32, i32, i32
  }
  func.func @transform_3(%arg0: i32) -> (i32, i32, i32) {
    %c0_i32 = arith.constant 0 : i32
    %c0_i32_0 = arith.constant 0 : i32
    %c0_i32_1 = arith.constant 0 : i32
    return %arg0, %c0_i32, %c0_i32_0 : i32, i32, i32
  }
}

</mosaic_0001>

<llo_original>
// kernel: tpu_custom_call.1
$region0: #{tpu_custom_call.1}
  #allocation0 [shape = 'u32[]', space=smem, size = 0x4, offset = 0x4, fixed_abs, tag = 'smem constant byte address 0x4 - core index']
  #allocation1 [shape = 'u32[144,128]{1,0:T(1,128)}', space=vmem, size = 0x12000, scoped, tag = 'internal scratch']
  %s0 = inlined_call_operand.hbm [shape: f32[2,8,256], index: 0, kind: input, shape index: {}]
  %s1 = inlined_call_operand.hbm [shape: f32[8,256], index: 1, kind: input, shape index: {}]
  %s2 = inlined_call_operand.hbm [shape: bf16[2,8,8], index: 2, kind: input, shape index: {}]
  %s3 = inlined_call_operand.hbm [shape: f32[2,8,256], index: 3, kind: output, shape index: {}]
  %s4 = sld [smem:[#allocation0]]
  $region57: #{tpu_custom_call.1} parent=0
    _
  %s6 = ssub.s32 1, %s4
  %s7 = scalar_select 0, %s6, %s4
  $region1: #{tpu_custom_call.1} parent=0
    #allocation2 [shape = 'u8[16384]{0}', space=vmem, size = 0x4000, scoped, tag = 'input window, operand 0']
    #allocation3 [shape = 's32[2]{0}', space=sflag, size = 0x8, scoped, tag = 'scoped memory for tpu_custom_call.1']
    #allocation4 [shape = 's32[2]{0}', space=sflag, size = 0x8, scoped, tag = 'scoped memory for tpu_custom_call.1']
    #allocation5 [shape = 'u8[8192]{0}', space=vmem, size = 0x2000, scoped, tag = 'input window, operand 1, single buffered']
    #allocation6 [shape = 's32[1]{0}', space=sflag, size = 0x4, scoped, tag = 'scoped memory for tpu_custom_call.1']
    #allocation7 [shape = 'u8[4096]{0}', space=vmem, size = 0x1000, scoped, tag = 'input window, operand 2, single buffered']
    #allocation8 [shape = 'u8[16384]{0}', space=vmem, size = 0x4000, scoped, tag = 'output window, operand 0']
    %8 = vsyncpa [#allocation3], 0
    %s9 = scalar_lea.sflag [#allocation3], 1
    %10 = vsyncpa %s9, 0
    %11 = vsyncpa [#allocation6], 0
    %12 = vsyncpa [#allocation4], 0
    %s13 = scalar_lea.sflag [#allocation4], 1
    %14 = vsyncpa %s13, 0
    loop: start=0, step=1, limit=4
    $region2: #{tpu_custom_call.1} parent=1 // loop_pre_header
      _
    $region3: #{tpu_custom_call.1} parent=1 // loop_header
      %s16 = sphi 0, %s20
      %p17 = scmp.ge.s32.totalorder %s16, 4
      %s26 = sphi 0, %s28
      %s29 = sphi 0, %s26
      %s30 = sphi 0, %s29
      %s46 = sphi 0, %s30
      %s50 = sphi 0, %s50
      %s52 = sphi 0, %s50
      %s53 = sphi 0, %s52
      %s67 = sphi 0, %s53
      %s71 = sphi 0, %s71
      %s73 = sphi 0, %s71
      %s74 = sphi 0, %s73
      %s88 = sphi 0, %s74
      %s94 = sphi 0, %s96
      %s97 = sphi 0, %s94
      %s98 = sphi 0, %s97
      %s114 = sphi 0, %s98
    $region4: #{tpu_custom_call.1} parent=1 // loop_header_branch
      %19 = sbr.rel (%p17) target = $region8
    $region5: #{tpu_custom_call.1} parent=1 // loop_body
      %s21 = ssub.s32 %s16, 1
      %s22 = ssub.s32 %s16, 2
      %s23 = sadd.s32 %s16, 1
      %s24 = ssub.s32 %s16, %s23
      %p25 = scmp.eq.s32.totalorder %s24, 0
      %s27 = sadd.s32 %s26, 1
      %s28 = scalar_select %p25, %s26, %s27
      %p31 = pneg %p25
      %p32 = scmp.eq.s32.totalorder %s16, 1
      %p33 = por %p31, %p32
      %p34 = scmp.ne.s32.totalorder %s26, %s29
      %p35 = scmp.eq.s32.totalorder %s16, 0
      %p36 = por %p34, %p35
      %p37 = scmp.ne.s32.totalorder %s26, %s29
      %p38 = scmp.eq.s32.totalorder %s21, 1
      %p39 = por %p37, %p38
      %p40 = scmp.ne.s32.totalorder %s29, %s30
      %p41 = scmp.eq.s32.totalorder %s21, 0
      %p42 = por %p40, %p41
      %p43 = scmp.ne.s32.totalorder %s29, %s30
      %p44 = scmp.eq.s32.totalorder %s22, 1
      %p45 = por %p43, %p44
      %p47 = scmp.ne.s32.totalorder %s30, %s46
      %p48 = scmp.eq.s32.totalorder %s22, 0
      %p49 = por %p47, %p48
      %s51 = sadd.s32 %s50, 1
      %p54 = scmp.eq.s32.totalorder %s16, 1
      %p55 = scmp.ne.s32.totalorder %s50, %s52
      %p56 = scmp.eq.s32.totalorder %s16, 0
      %p57 = por %p55, %p56
      %p58 = scmp.ne.s32.totalorder %s50, %s52
      %p59 = scmp.eq.s32.totalorder %s21, 1
      %p60 = por %p58, %p59
      %p61 = scmp.ne.s32.totalorder %s52, %s53
      %p62 = scmp.eq.s32.totalorder %s21, 0
      %p63 = por %p61, %p62
      %p64 = scmp.ne.s32.totalorder %s52, %s53
      %p65 = scmp.eq.s32.totalorder %s22, 1
      %p66 = por %p64, %p65
      %p68 = scmp.ne.s32.totalorder %s53, %s67
      %p69 = scmp.eq.s32.totalorder %s22, 0
      %p70 = por %p68, %p69
      %s72 = sadd.s32 %s71, 1
      %p75 = scmp.eq.s32.totalorder %s16, 1
      %p76 = scmp.ne.s32.totalorder %s71, %s73
      %p77 = scmp.eq.s32.totalorder %s16, 0
      %p78 = por %p76, %p77
      %p79 = scmp.ne.s32.totalorder %s71, %s73
      %p80 = scmp.eq.s32.totalorder %s21, 1
      %p81 = por %p79, %p80
      %p82 = scmp.ne.s32.totalorder %s73, %s74
      %p83 = scmp.eq.s32.totalorder %s21, 0
      %p84 = por %p82, %p83
      %p85 = scmp.ne.s32.totalorder %s73, %s74
      %p86 = scmp.eq.s32.totalorder %s22, 1
      %p87 = por %p85, %p86
      %p89 = scmp.ne.s32.totalorder %s74, %s88
      %p90 = scmp.eq.s32.totalorder %s22, 0
      %p91 = por %p89, %p90
      %s92 = ssub.s32 %s16, %s23
      %p93 = scmp.eq.s32.totalorder %s92, 0
      %s95 = sadd.s32 %s94, 1
      %s96 = scalar_select %p93, %s94, %s95
      %p99 = pneg %p93
      %p100 = scmp.eq.s32.totalorder %s16, 1
      %p101 = por %p99, %p100
      %p102 = scmp.ne.s32.totalorder %s94, %s97
      %p103 = scmp.eq.s32.totalorder %s16, 0
      %p104 = por %p102, %p103
      %p105 = scmp.ne.s32.totalorder %s94, %s97
      %p106 = scmp.eq.s32.totalorder %s21, 1
      %p107 = por %p105, %p106
      %p108 = scmp.ne.s32.totalorder %s97, %s98
      %p109 = scmp.eq.s32.totalorder %s21, 0
      %p110 = por %p108, %p109
      %p111 = scmp.ne.s32.totalorder %s97, %s98
      %p112 = scmp.eq.s32.totalorder %s22, 1
      %p113 = por %p111, %p112
      %p115 = scmp.ne.s32.totalorder %s98, %s114
      %p116 = scmp.eq.s32.totalorder %s22, 0
      %p117 = por %p115, %p116
      %p118 = scmp.le.s32.totalorder 1, %s16
      %p119 = scmp.lt.s32.totalorder %s16, 3
      %p120 = pnand %p118, %p119
      %p121 = pneg %p120
      // Predicated region
      $region9: #{tpu_custom_call.1} parent=5 // pred_check
        _
      $region10: #{tpu_custom_call.1} parent=5 // pred_check_branch
        %123 = sbr.rel (%p120) target = $region12
      $region11: #{tpu_custom_call.1} parent=5 // pred_region
        %s124 = ssub.s32 %s16, 1
        // Predicated region
        $region13: #{tpu_custom_call.1} parent=11 // pred_check
          %p125 = pneg %p63
        $region14: #{tpu_custom_call.1} parent=11 // pred_check_branch
          %127 = sbr.rel (%p125) target = $region16
        $region15: #{tpu_custom_call.1} parent=11 // pred_region
          %s129 = ssub.s32 256, 256
          %130 = vsyncadd [#allocation6], %s129
          %s132 = sshll.u32 [#allocation5], 4
          %s133 = int_to_ptr.vmem [resolvable:$true] %s132
          %135 = dma.hbm_to_vmem [thread:$0]  %s1, 256, %s133, [#allocation6]
        $region16: #{tpu_custom_call.1} parent=11 // pred_fallthru
          _
        // Predicated region
        $region17: #{tpu_custom_call.1} parent=11 // pred_check
          %p136 = pneg %p84
        $region18: #{tpu_custom_call.1} parent=11 // pred_check_branch
          %138 = sbr.rel (%p136) target = $region20
        $region19: #{tpu_custom_call.1} parent=11 // pred_region
          %s140 = ssub.s32 128, 128
          %141 = vsyncadd [#allocation6], %s140
          %s142 = sshll.u32 [#allocation7], 4
          %s143 = int_to_ptr.vmem [resolvable:$true] %s142
          %148 = dma.hbm_to_vmem [thread:$0]  %s2, 128, %s143, [#allocation6], 64, 64, 4
        $region20: #{tpu_custom_call.1} parent=11 // pred_fallthru
          _
      $region12: #{tpu_custom_call.1} parent=5 // pred_fallthru
        _
      %p149 = scmp.lt.s32.totalorder %s16, 2
      // Predicated region
      $region21: #{tpu_custom_call.1} parent=5 // pred_check
        %p150 = pneg %p149
      $region22: #{tpu_custom_call.1} parent=5 // pred_check_branch
        %152 = sbr.rel (%p150) target = $region24
      $region23: #{tpu_custom_call.1} parent=5 // pred_region
        // Predicated region
        $region25: #{tpu_custom_call.1} parent=23 // pred_check
          %p153 = pneg %p36
        $region26: #{tpu_custom_call.1} parent=23 // pred_check_branch
          %155 = sbr.rel (%p153) target = $region28
        $region27: #{tpu_custom_call.1} parent=23 // pred_region
          %s156 = sand.u32 %s26, 1
          %s157 = scalar_lea.sflag [#allocation3], %s156
          %s158 = sand.u32 %s26, 1
          %s159 = smul.addr %s158, 16
          %s160 = scalar_lea.vmem [#allocation2], %s159
          %s162 = ssub.s32 256, 256
          %163 = vsyncadd %s157, %s162
          %s164 = smul.addr %s16, 2
          %s165 = smul.addr %s164, 128
          %s166 = scalar_lea.hbm %s0, %s165
          %s168 = sshll.u32 %s160, 4
          %s169 = int_to_ptr.vmem [resolvable:$true] %s168
          %171 = dma.hbm_to_vmem [thread:$0]  %s166, 256, %s169, %s157
        $region28: #{tpu_custom_call.1} parent=23 // pred_fallthru
          _
      $region24: #{tpu_custom_call.1} parent=5 // pred_fallthru
        _
      %p172 = scmp.le.s32.totalorder 1, %s16
      %p173 = scmp.lt.s32.totalorder %s16, 3
      %p174 = pnand %p172, %p173
      %p175 = pneg %p174
      // Predicated region
      $region29: #{tpu_custom_call.1} parent=5 // pred_check
        _
      $region30: #{tpu_custom_call.1} parent=5 // pred_check_branch
        %177 = sbr.rel (%p174) target = $region32
      $region31: #{tpu_custom_call.1} parent=5 // pred_region
        %s178 = ssub.s32 %s16, 1
        %s179 = sand.u32 %s29, 1
        %s180 = scalar_lea.sflag [#allocation3], %s179
        %s181 = sand.u32 %s29, 1
        %s182 = smul.addr %s181, 16
        %s183 = scalar_lea.vmem [#allocation2], %s182
        // Predicated region
        $region33: #{tpu_custom_call.1} parent=31 // pred_check
          %p184 = pneg %p42
        $region34: #{tpu_custom_call.1} parent=31 // pred_check_branch
          %186 = sbr.rel (%p184) target = $region36
        $region35: #{tpu_custom_call.1} parent=31 // pred_region
          %187 = dma.done %s180, 256
        $region36: #{tpu_custom_call.1} parent=31 // pred_fallthru
          _
        // Predicated region
        $region37: #{tpu_custom_call.1} parent=31 // pred_check
          %p188 = pneg %p63
        $region38: #{tpu_custom_call.1} parent=31 // pred_check_branch
          %190 = sbr.rel (%p188) target = $region40
        $region39: #{tpu_custom_call.1} parent=31 // pred_region
          %191 = dma.done [#allocation6], 256
        $region40: #{tpu_custom_call.1} parent=31 // pred_fallthru
          _
        // Predicated region
        $region41: #{tpu_custom_call.1} parent=31 // pred_check
          %p192 = pneg %p84
        $region42: #{tpu_custom_call.1} parent=31 // pred_check_branch
          %194 = sbr.rel (%p192) target = $region44
        $region43: #{tpu_custom_call.1} parent=31 // pred_region
          %195 = dma.done [#allocation6], 128
        $region44: #{tpu_custom_call.1} parent=31 // pred_fallthru
          _
        %s196 = sand.u32 %s29, 1
        %s197 = scalar_lea.sflag [#allocation3], %s196
        %s198 = sand.u32 %s29, 1
        %s199 = smul.addr %s198, 16
        %s200 = scalar_lea.vmem [#allocation2], %s199
        %p201 = pneg %p42
        %p202 = pneg %p39
        %p203 = pneg %p63
        %p204 = pneg %p60
        %p205 = pneg %p84
        %p206 = pneg %p81
        %p207 = pneg %p110
        %p208 = pneg %p107
        %s209 = sand.u32 %s97, 1
        %s210 = scalar_lea.sflag [#allocation4], %s209
        %s211 = sand.u32 %s97, 1
        %s212 = smul.addr %s211, 16
        %s213 = scalar_lea.vmem [#allocation8], %s212
        %v215 = vld [vmem:[%s183] sm:$0xff]
        %v216 = vld [vmem:[%s183 + $0x8] sm:$0xff]
        %v217 = vld [vmem:[#allocation5] sm:$0xff]
        %v218 = vld [vmem:[#allocation5 + $0x8] sm:$0xff]
        %v219 = vlaneseq
        %v220 = vshrl.u32 %v219, 7
        %v221 = vsub.s32 0, %v220
        %v222 = vrot.slane %v217, %v221
        %v223 = vlaneseq
        %v224 = vshrl.u32 %v223, 7
        %v225 = vsub.s32 0, %v224
        %v226 = vrot.slane %v218, %v225
        %vm227 = vcmp.gt.f32.partialorder %v222, 0.5
        %vm228 = vcmp.gt.f32.partialorder %v226, 0.5
        %v229 = vlaneseq
        %v230 = vshrl.u32 %v229, 7
        %v231 = vsub.s32 1, %v230
        %v232 = vrot.slane %v217, %v231
        %v233 = vlaneseq
        %v234 = vshrl.u32 %v233, 7
        %v235 = vsub.s32 1, %v234
        %v236 = vrot.slane %v218, %v235
        %vm237 = vcmp.gt.f32.partialorder %v232, 0.5
        %vm238 = vcmp.gt.f32.partialorder %v236, 0.5
        %v239 = vlaneseq
        %v240 = vshrl.u32 %v239, 7
        %v241 = vsub.s32 2, %v240
        %v242 = vrot.slane %v217, %v241
        %v243 = vlaneseq
        %v244 = vshrl.u32 %v243, 7
        %v245 = vsub.s32 2, %v244
        %v246 = vrot.slane %v218, %v245
        %vm247 = vcmp.gt.f32.partialorder %v242, 0.5
        %vm248 = vcmp.gt.f32.partialorder %v246, 0.5
        %v249 = vlaneseq
        %v250 = vshrl.u32 %v249, 7
        %v251 = vsub.s32 3, %v250
        %v252 = vrot.slane %v217, %v251
        %v253 = vlaneseq
        %v254 = vshrl.u32 %v253, 7
        %v255 = vsub.s32 3, %v254
        %v256 = vrot.slane %v218, %v255
        %vm257 = vcmp.gt.f32.partialorder %v252, 0.5
        %vm258 = vcmp.gt.f32.partialorder %v256, 0.5
        %v259 = vlaneseq
        %v260 = vshrl.u32 %v259, 7
        %v261 = vsub.s32 4, %v260
        %v262 = vrot.slane %v217, %v261
        %v263 = vlaneseq
        %v264 = vshrl.u32 %v263, 7
        %v265 = vsub.s32 4, %v264
        %v266 = vrot.slane %v218, %v265
        %vm267 = vcmp.gt.f32.partialorder %v262, 0.5
        %vm268 = vcmp.gt.f32.partialorder %v266, 0.5
        %v269 = vlaneseq
        %v270 = vshrl.u32 %v269, 7
        %v271 = vsub.s32 5, %v270
        %v272 = vrot.slane %v217, %v271
        %v273 = vlaneseq
        %v274 = vshrl.u32 %v273, 7
        %v275 = vsub.s32 5, %v274
        %v276 = vrot.slane %v218, %v275
        %vm277 = vcmp.gt.f32.partialorder %v272, 0.5
        %vm278 = vcmp.gt.f32.partialorder %v276, 0.5
        %v279 = vlaneseq
        %v280 = vshrl.u32 %v279, 7
        %v281 = vsub.s32 6, %v280
        %v282 = vrot.slane %v217, %v281
        %v283 = vlaneseq
        %v284 = vshrl.u32 %v283, 7
        %v285 = vsub.s32 6, %v284
        %v286 = vrot.slane %v218, %v285
        %vm287 = vcmp.gt.f32.partialorder %v282, 0.5
        %vm288 = vcmp.gt.f32.partialorder %v286, 0.5
        %v289 = vlaneseq
        %v290 = vshrl.u32 %v289, 7
        %v291 = vsub.s32 7, %v290
        %v292 = vrot.slane %v217, %v291
        %v293 = vlaneseq
        %v294 = vshrl.u32 %v293, 7
        %v295 = vsub.s32 7, %v294
        %v296 = vrot.slane %v218, %v295
        %vm297 = vcmp.gt.f32.partialorder %v292, 0.5
        %vm298 = vcmp.gt.f32.partialorder %v296, 0.5
        %299 = vrot.lane.b32.xlu0 %v215, 2
        %v300 = vpop.permute.xlu0 %299
        %301 = vrot.lane.b32.xlu0 %v216, 2
        %v302 = vpop.permute.xlu0 %301
        %v303 = vlaneseq
        %v304 = vand.u32 %v303, 127
        %vm305 = vcmp.lt.s32.totalorder %v304, 2
        %v306 = vsel %vm305, %v300, %v302
        %v307 = vsel %vm305, %v302, %v300
        %v308 = vsel %vm227, %v307, 0.0
        %v309 = vsel %vm228, %v306, 0.0
        %v310 = vadd.f32 %v215, %v308
        %v311 = vadd.f32 %v216, %v309
        %312 = vrot.lane.b32.xlu0 %v215, 1
        %v313 = vpop.permute.xlu0 %312
        %314 = vrot.lane.b32.xlu0 %v216, 1
        %v315 = vpop.permute.xlu0 %314
        %vm316 = vcmp.lt.s32.totalorder %v304, 1
        %v317 = vsel %vm316, %v313, %v315
        %v318 = vsel %vm316, %v315, %v313
        %v319 = vsel %vm237, %v318, 0.0
        %v320 = vsel %vm238, %v317, 0.0
        %v321 = vadd.f32 %v310, %v319
        %v322 = vadd.f32 %v311, %v320
        %323 = vrot.lane.b32.xlu0 %v215, 127
        %v324 = vpop.permute.xlu0 %323
        %325 = vrot.lane.b32.xlu0 %v216, 127
        %v326 = vpop.permute.xlu0 %325
        %vm327 = vcmp.lt.s32.totalorder %v304, 127
        %v328 = vsel %vm327, %v324, %v326
        %v329 = vsel %vm327, %v326, %v324
        %v330 = vsel %vm247, %v328, 0.0
        %v331 = vsel %vm248, %v329, 0.0
        %v332 = vadd.f32 %v321, %v330
        %v333 = vadd.f32 %v322, %v331
        %334 = vrot.lane.b32.xlu0 %v215, 126
        %v335 = vpop.permute.xlu0 %334
        %336 = vrot.lane.b32.xlu0 %v216, 126
        %v337 = vpop.permute.xlu0 %336
        %vm338 = vcmp.lt.s32.totalorder %v304, 126
        %v339 = vsel %vm338, %v335, %v337
        %v340 = vsel %vm338, %v337, %v335
        %v341 = vsel %vm257, %v339, 0.0
        %v342 = vsel %vm258, %v340, 0.0
        %v343 = vadd.f32 %v332, %v341
        %v344 = vadd.f32 %v333, %v342
        %345 = vrot.lane.b32.xlu0 %v343, 32
        %v346 = vpop.permute.xlu0 %345
        %347 = vrot.lane.b32.xlu0 %v344, 32
        %v348 = vpop.permute.xlu0 %347
        %vm349 = vcmp.lt.s32.totalorder %v304, 32
        %v350 = vsel %vm349, %v346, %v348
        %v351 = vsel %vm349, %v348, %v346
        %v352 = vsel %vm267, %v351, 0.0
        %v353 = vsel %vm268, %v350, 0.0
        %v354 = vadd.f32 %v343, %v352
        %v355 = vadd.f32 %v344, %v353
        %356 = vrot.lane.b32.xlu0 %v343, 16
        %v357 = vpop.permute.xlu0 %356
        %358 = vrot.lane.b32.xlu0 %v344, 16
        %v359 = vpop.permute.xlu0 %358
        %vm360 = vcmp.lt.s32.totalorder %v304, 16
        %v361 = vsel %vm360, %v357, %v359
        %v362 = vsel %vm360, %v359, %v357
        %v363 = vsel %vm277, %v362, 0.0
        %v364 = vsel %vm278, %v361, 0.0
        %v365 = vadd.f32 %v354, %v363
        %v366 = vadd.f32 %v355, %v364
        %367 = vrot.lane.b32.xlu0 %v343, 112
        %v368 = vpop.permute.xlu0 %367
        %369 = vrot.lane.b32.xlu0 %v344, 112
        %v370 = vpop.permute.xlu0 %369
        %vm371 = vcmp.lt.s32.totalorder %v304, 112
        %v372 = vsel %vm371, %v368, %v370
        %v373 = vsel %vm371, %v370, %v368
        %v374 = vsel %vm287, %v372, 0.0
        %v375 = vsel %vm288, %v373, 0.0
        %v376 = vadd.f32 %v365, %v374
        %v377 = vadd.f32 %v366, %v375
        %378 = vrot.lane.b32.xlu0 %v343, 96
        %v379 = vpop.permute.xlu0 %378
        %380 = vrot.lane.b32.xlu0 %v344, 96
        %v381 = vpop.permute.xlu0 %380
        %vm382 = vcmp.lt.s32.totalorder %v304, 96
        %v383 = vsel %vm382, %v379, %v381
        %v384 = vsel %vm382, %v381, %v379
        %v385 = vsel %vm297, %v383, 0.0
        %v386 = vsel %vm298, %v384, 0.0
        %v387 = vadd.f32 %v376, %v385
        %v388 = vadd.f32 %v377, %v386
        %v389 = vld [vmem:[#allocation7] sm:$0xf]
        %v390 = vpack.c.bf16 %v387, %v387
        %v391 = vpack.c.bf16 %v388, %v388
        %vm392 = vcmask 64512
        %v394 = vsel %vm392, %v389, 0
        %vm396 = vcmask 1043456
        %v398 = vsel %vm396, %v390, 0
        %v401 = vsel %vm396, %v391, 0
        %403 = vmatprep.subr.bf16.mxu0 0
        %404 = vmatpush1.bf16.msra.mxu0 0
        %405 = vmatprep.subr.bf16.mxu0 0
        %406 = vmatpush1.bf16.msra.mxu0 0
        %407 = vmatprep.subr.bf16.mxu0 0
        %408 = vmatpush1.bf16.msra.mxu0 0
        %409 = vmatprep.subr.bf16.mxu0 0
        %410 = vmatpush1.bf16.msra.mxu0 0
        %411 = vmatprep.subr.bf16.mxu0 0
        %412 = vmatpush1.bf16.msra.mxu0 0
        %413 = vmatprep.subr.bf16.mxu0 0
        %414 = vmatpush1.bf16.msra.mxu0 0
        %415 = vmatprep.subr.bf16.mxu0 0
        %416 = vmatpush1.bf16.msra.mxu0 0
        %417 = vmatprep.subr.bf16.mxu0 %v401
        %418 = vmatpush1.bf16.msra.mxu0 %v398
        %419 = vmatprep.subr.bf16.mxu0 0
        %420 = vmatpush2.bf16.msra.mxu0 0
        %421 = vmatprep.subr.bf16.mxu0 0
        %422 = vmatpush2.bf16.msra.mxu0 0
        %423 = vmatprep.subr.bf16.mxu0 0
        %424 = vmatpush2.bf16.msra.mxu0 0
        %425 = vmatprep.subr.bf16.mxu0 0
        %426 = vmatpush2.bf16.msra.mxu0 0
        %427 = vmatprep.subr.bf16.mxu0 0
        %428 = vmatpush2.bf16.msra.mxu0 0
        %429 = vmatprep.subr.bf16.mxu0 0
        %430 = vmatpush2.bf16.msra.mxu0 0
        %431 = vmatprep.subr.bf16.mxu0 0
        %432 = vmatpush2.bf16.msra.mxu0 0
        %433 = vmatprep.subr.bf16.mxu0 0
        %434 = vmatpush2.bf16.msra.mxu0 0
        %435 = vmatprep.mubr.bf16.mxu0 0
        %436 = vmatmul.mubr.bf16.gmra.mxu0 %v394
        %v437 = vpop.f32.mrf.mxu0
        %v438 = vadd.f32 0.0, %v437
        %v439 = vpop.f32.mrf.mxu0
        %v440 = vadd.f32 0.0, %v439
        %v441 = vpop.f32.mrf.mxu0
        %v442 = vpop.f32.mrf.mxu0
        %443 = vdwg.mxu0
        %v444 = vadd.f32 %v215, %v438
        %v445 = vadd.f32 %v216, %v440
        %446 = vrot.lane.b32.xlu0 %v438, 2
        %v447 = vpop.permute.xlu0 %446
        %448 = vrot.lane.b32.xlu0 %v440, 2
        %v449 = vpop.permute.xlu0 %448
        %v450 = vsel %vm305, %v447, %v449
        %v451 = vsel %vm305, %v449, %v447
        %v452 = vsel %vm227, %v451, 0.0
        %v453 = vsel %vm228, %v450, 0.0
        %v454 = vadd.f32 %v438, %v452
        %v455 = vadd.f32 %v440, %v453
        %456 = vrot.lane.b32.xlu0 %v438, 1
        %v457 = vpop.permute.xlu0 %456
        %458 = vrot.lane.b32.xlu0 %v440, 1
        %v459 = vpop.permute.xlu0 %458
        %v460 = vsel %vm316, %v457, %v459
        %v461 = vsel %vm316, %v459, %v457
        %v462 = vsel %vm237, %v461, 0.0
        %v463 = vsel %vm238, %v460, 0.0
        %v464 = vadd.f32 %v454, %v462
        %v465 = vadd.f32 %v455, %v463
        %466 = vrot.lane.b32.xlu0 %v438, 127
        %v467 = vpop.permute.xlu0 %466
        %468 = vrot.lane.b32.xlu0 %v440, 127
        %v469 = vpop.permute.xlu0 %468
        %v470 = vsel %vm327, %v467, %v469
        %v471 = vsel %vm327, %v469, %v467
        %v472 = vsel %vm247, %v470, 0.0
        %v473 = vsel %vm248, %v471, 0.0
        %v474 = vadd.f32 %v464, %v472
        %v475 = vadd.f32 %v465, %v473
        %476 = vrot.lane.b32.xlu0 %v438, 126
        %v477 = vpop.permute.xlu0 %476
        %478 = vrot.lane.b32.xlu0 %v440, 126
        %v479 = vpop.permute.xlu0 %478
        %v480 = vsel %vm338, %v477, %v479
        %v481 = vsel %vm338, %v479, %v477
        %v482 = vsel %vm257, %v480, 0.0
        %v483 = vsel %vm258, %v481, 0.0
        %v484 = vadd.f32 %v474, %v482
        %v485 = vadd.f32 %v475, %v483
        %486 = vrot.lane.b32.xlu0 %v484, 32
        %v487 = vpop.permute.xlu0 %486
        %488 = vrot.lane.b32.xlu0 %v485, 32
        %v489 = vpop.permute.xlu0 %488
        %v490 = vsel %vm349, %v487, %v489
        %v491 = vsel %vm349, %v489, %v487
        %v492 = vsel %vm267, %v491, 0.0
        %v493 = vsel %vm268, %v490, 0.0
        %v494 = vadd.f32 %v484, %v492
        %v495 = vadd.f32 %v485, %v493
        %496 = vrot.lane.b32.xlu0 %v484, 16
        %v497 = vpop.permute.xlu0 %496
        %498 = vrot.lane.b32.xlu0 %v485, 16
        %v499 = vpop.permute.xlu0 %498
        %v500 = vsel %vm360, %v497, %v499
        %v501 = vsel %vm360, %v499, %v497
        %v502 = vsel %vm277, %v501, 0.0
        %v503 = vsel %vm278, %v500, 0.0
        %v504 = vadd.f32 %v494, %v502
        %v505 = vadd.f32 %v495, %v503
        %506 = vrot.lane.b32.xlu0 %v484, 112
        %v507 = vpop.permute.xlu0 %506
        %508 = vrot.lane.b32.xlu0 %v485, 112
        %v509 = vpop.permute.xlu0 %508
        %v510 = vsel %vm371, %v507, %v509
        %v511 = vsel %vm371, %v509, %v507
        %v512 = vsel %vm287, %v510, 0.0
        %v513 = vsel %vm288, %v511, 0.0
        %v514 = vadd.f32 %v504, %v512
        %v515 = vadd.f32 %v505, %v513
        %516 = vrot.lane.b32.xlu0 %v484, 96
        %v517 = vpop.permute.xlu0 %516
        %518 = vrot.lane.b32.xlu0 %v485, 96
        %v519 = vpop.permute.xlu0 %518
        %v520 = vsel %vm382, %v517, %v519
        %v521 = vsel %vm382, %v519, %v517
        %v522 = vsel %vm297, %v520, 0.0
        %v523 = vsel %vm298, %v521, 0.0
        %v524 = vadd.f32 %v514, %v522
        %v525 = vadd.f32 %v515, %v523
        %s526 = scalar_lea.vmem [#allocation7], 4
        %v527 = vld [vmem:[%s526] sm:$0xf]
        %v528 = vpack.c.bf16 %v524, %v524
        %v529 = vpack.c.bf16 %v525, %v525
        %v531 = vsel %vm392, %v527, 0
        %v534 = vsel %vm396, %v528, 0
        %v537 = vsel %vm396, %v529, 0
        %539 = vmatprep.subr.bf16.mxu0 0
        %540 = vmatpush1.bf16.msra.mxu0 0
        %541 = vmatprep.subr.bf16.mxu0 0
        %542 = vmatpush1.bf16.msra.mxu0 0
        %543 = vmatprep.subr.bf16.mxu0 0
        %544 = vmatpush1.bf16.msra.mxu0 0
        %545 = vmatprep.subr.bf16.mxu0 0
        %546 = vmatpush1.bf16.msra.mxu0 0
        %547 = vmatprep.subr.bf16.mxu0 0
        %548 = vmatpush1.bf16.msra.mxu0 0
        %549 = vmatprep.subr.bf16.mxu0 0
        %550 = vmatpush1.bf16.msra.mxu0 0
        %551 = vmatprep.subr.bf16.mxu0 0
        %552 = vmatpush1.bf16.msra.mxu0 0
        %553 = vmatprep.subr.bf16.mxu0 %v537
        %554 = vmatpush1.bf16.msra.mxu0 %v534
        %555 = vmatprep.subr.bf16.mxu0 0
        %556 = vmatpush2.bf16.msra.mxu0 0
        %557 = vmatprep.subr.bf16.mxu0 0
        %558 = vmatpush2.bf16.msra.mxu0 0
        %559 = vmatprep.subr.bf16.mxu0 0
        %560 = vmatpush2.bf16.msra.mxu0 0
        %561 = vmatprep.subr.bf16.mxu0 0
        %562 = vmatpush2.bf16.msra.mxu0 0
        %563 = vmatprep.subr.bf16.mxu0 0
        %564 = vmatpush2.bf16.msra.mxu0 0
        %565 = vmatprep.subr.bf16.mxu0 0
        %566 = vmatpush2.bf16.msra.mxu0 0
        %567 = vmatprep.subr.bf16.mxu0 0
        %568 = vmatpush2.bf16.msra.mxu0 0
        %569 = vmatprep.subr.bf16.mxu0 0
        %570 = vmatpush2.bf16.msra.mxu0 0
        %571 = vmatprep.mubr.bf16.mxu0 0
        %572 = vmatmul.mubr.bf16.gmra.mxu0 %v531
        %v573 = vpop.f32.mrf.mxu0
        %v574 = vadd.f32 0.0, %v573
        %v575 = vpop.f32.mrf.mxu0
        %v576 = vadd.f32 0.0, %v575
        %v577 = vpop.f32.mrf.mxu0
        %v578 = vpop.f32.mrf.mxu0
        %579 = vdwg.mxu0
        %v580 = vadd.f32 %v444, %v574
        %v581 = vadd.f32 %v445, %v576
        %582 = vst [vmem:[%s213] sm:$0xff] %v580
        %583 = vst [vmem:[%s213 + $0x8] sm:$0xff] %v581
        %s584 = sand.u32 %s97, 1
        %s585 = scalar_lea.sflag [#allocation4], %s584
        %s586 = sand.u32 %s97, 1
        %s587 = smul.addr %s586, 16
        %s588 = scalar_lea.vmem [#allocation8], %s587
        // Predicated region
        $region45: #{tpu_custom_call.1} parent=31 // pred_check
          %p589 = pneg %p107
        $region46: #{tpu_custom_call.1} parent=31 // pred_check_branch
          %591 = sbr.rel (%p589) target = $region48
        $region47: #{tpu_custom_call.1} parent=31 // pred_region
          %s593 = ssub.s32 256, 256
          %594 = vsyncadd %s585, %s593
          %s595 = smul.addr %s21, 2
          %s596 = smul.addr %s595, 128
          %s597 = scalar_lea.hbm %s3, %s596
          %s599 = sshll.u32 %s588, 4
          %s600 = int_to_ptr.vmem [resolvable:$true] %s599
          %602 = dma.vmem_to_hbm [thread:$0]  %s600, 256, %s597, %s585
        $region48: #{tpu_custom_call.1} parent=31 // pred_fallthru
          _
      $region32: #{tpu_custom_call.1} parent=5 // pred_fallthru
        _
      %p603 = scmp.le.s32.totalorder 2, %s16
      // Predicated region
      $region49: #{tpu_custom_call.1} parent=5 // pred_check
        %p604 = pneg %p603
      $region50: #{tpu_custom_call.1} parent=5 // pred_check_branch
        %606 = sbr.rel (%p604) target = $region52
      $region51: #{tpu_custom_call.1} parent=5 // pred_region
        %s607 = ssub.s32 %s16, 2
        // Predicated region
        $region53: #{tpu_custom_call.1} parent=51 // pred_check
          %p608 = pneg %p113
        $region54: #{tpu_custom_call.1} parent=51 // pred_check_branch
          %610 = sbr.rel (%p608) target = $region56
        $region55: #{tpu_custom_call.1} parent=51 // pred_region
          %s611 = sand.u32 %s98, 1
          %s612 = scalar_lea.sflag [#allocation4], %s611
          %s613 = sand.u32 %s98, 1
          %s614 = smul.addr %s613, 16
          %s615 = scalar_lea.vmem [#allocation8], %s614
          %616 = dma.done %s612, 256
        $region56: #{tpu_custom_call.1} parent=51 // pred_fallthru
          _
      $region52: #{tpu_custom_call.1} parent=5 // pred_fallthru
        _
    $region6: #{tpu_custom_call.1} parent=1 // loop_footer
      %s20 = sadd.s32 1, %s16
    $region7: #{tpu_custom_call.1} parent=1 // loop_footer_branch
      %15 = sbr.rel target = $region3
    $region8: #{tpu_custom_call.1} parent=1 // loop_exit
      _
    %617 = vsyncpa [#allocation3], 1
    %s618 = scalar_lea.sflag [#allocation3], 1
    %619 = vsyncpa %s618, 1
    %620 = vsyncpa [#allocation6], 1
    %621 = vsyncpa [#allocation4], 1
    %s622 = scalar_lea.sflag [#allocation4], 1
    %623 = vsyncpa %s622, 1

</llo_original>
